<compile_context>
chip_gen: v7x
topology: tpu7x:2x2x1
jax: 0.10.0
libtpu: 0.0.40
codegen_flags: <defaults>
</compile_context>

<pallas_src>
import jax
import jax.numpy as jnp
from jax.experimental import pallas as pl
from jax.experimental.pallas import tpu as pltpu


_LANE = 128
_SUBLANE = 8
# Per-block byte cap. With default double-buffering on input and output, peak
# VMEM ~= 4x this (16 MiB) -- inside the 32 MiB scoped limit we request and
# inside v7x's 64 MiB physical VMEM.
_MAX_BLOCK_BYTES = 4 * 1024 * 1024
# Don't shrink blocks below this just to get more grid steps.
_MIN_BLOCK_BYTES = 256 * 1024
# Aim for at least this many grid steps (>= 3-4 per TC on v7x megacore).
_TARGET_GRID_STEPS = 8
# Below this, pallas_call launch/DMA-setup overhead dominates; let XLA fuse.
_SMALL_BYPASS_BYTES = 256 * 1024
# Lane-dense slab widths to try (widest first); all multiples of 128.
_WIDTH_CANDIDATES = (2048, 1024, 512, 256, 128)


def _swish_kernel(x_ref, o_ref):
    x = x_ref[...]
    if x.dtype == jnp.float32 or x.dtype == jnp.bfloat16:
        xc = x                      # bf16 runs natively on v6e/v7x VPU+EUP
    else:
        xc = x.astype(jnp.float32)  # f16 / others: compute in f32
    # sigmoid(x) = 0.5 * (1 + tanh(0.5 * x)): one EUP transcendental, the rest
    # is cheap VALU work; avoids an exact divide on the VALU.
    sig = 0.5 * (1.0 + jnp.tanh(0.5 * xc))
    o_ref[...] = (xc * sig).astype(o_ref.dtype)


def _round_up(n: int, m: int) -> int:
    return -(-n // m) * m


def _pick_layout(total: int, itemsize: int):
    """Pick a lane-dense 2D slab (rows, width) and a row-tile size tr."""
    # Dtype-aware sublane multiple: 8 for 32-bit, 16 for bf16/f16, 32 for int8.
    sub = max(_SUBLANE, 32 // max(1, itemsize))

    width = _LANE
    for w in _WIDTH_CANDIDATES:
        if total % w == 0:
            width = w
            break
    rows = total // width
    row_bytes = width * itemsize

    # Largest row tile (multiple of `sub`) under the per-block byte cap.
    cap = max(sub, (_MAX_BLOCK_BYTES // row_bytes) // sub * sub)
    # Prefer >= _TARGET_GRID_STEPS grid steps while blocks stay >= _MIN_BLOCK_BYTES.
    want = _round_up(max(1, -(-rows // _TARGET_GRID_STEPS)), sub)
    if want * row_bytes < _MIN_BLOCK_BYTES:
        want = max(sub, (_MIN_BLOCK_BYTES // row_bytes) // sub * sub)
    tr = min(cap, want)
    if tr >= rows:
        tr = rows  # single block == full array dims; (8,128) divisibility waived
    return rows, width, tr


def swish(x: jax.Array, *, min_pallas_bytes: int = _SMALL_BYPASS_BYTES) -> jax.Array:
    """Swish / SiLU: x * sigmoid(x), elementwise, preserves shape and dtype."""
    orig_shape = x.shape
    dtype = x.dtype
    total = x.size
    if total == 0:
        return x
    itemsize = jnp.dtype(dtype).itemsize
    nbytes = total * itemsize

    # Fallback paths where a Pallas launch cannot beat XLA's fused elementwise:
    #  * tiny tensors (launch overhead dominates)
    #  * ragged totals (not a multiple of 128 lanes: pad + slice would cost
    #    ~3x the HBM bytes of the op itself)
    #  * non-float dtypes (swish on integers is ill-defined)
    if (nbytes < min_pallas_bytes
            or total % _LANE != 0
            or not jnp.issubdtype(dtype, jnp.floating)):
        return x * jax.nn.sigmoid(x)

    rows, width, tr = _pick_layout(total, itemsize)
    slab = jnp.ravel(x).reshape(rows, width)   # metadata-only reshape, no copy
    grid = (pl.cdiv(rows, tr),)                # partial last block is masked

    out = pl.pallas_call(
        _swish_kernel,
        out_shape=jax.ShapeDtypeStruct((rows, width), dtype),
        grid_spec=pltpu.PrefetchScalarGridSpec(
            num_scalar_prefetch=0,
            grid=grid,
            in_specs=[pl.BlockSpec((tr, width), lambda i: (i, 0))],
            out_specs=pl.BlockSpec((tr, width), lambda i: (i, 0)),
        ),
        compiler_params=pltpu.CompilerParams(
            dimension_semantics=("parallel",),
            # Load-bearing on v5e (default scoped VMEM is 16 MiB there); safe
            # headroom on v6e (128 MiB physical) and v7x (64 MiB physical).
            vmem_limit_bytes=32 * 1024 * 1024,
        ),
        cost_estimate=pl.CostEstimate(
            flops=5 * total,
            transcendentals=total,
            bytes_accessed=2 * nbytes,
        ),
    )(slab)

    return out.reshape(orig_shape)


if __name__ == "__main__":
    key = jax.random.PRNGKey(0)

    # Primary test at the module's small NCHW shape. Force the Pallas path
    # (the default heuristic would bypass an 8 KiB tensor as too small).
    x = jax.random.normal(key, (2, 4, 16, 16), dtype=jnp.float32)
    y = jax.block_until_ready(swish(x, min_pallas_bytes=0))
    y_ref = x * jax.nn.sigmoid(x)
    assert y.shape == x.shape and y.dtype == x.dtype
    assert jnp.allclose(y, y_ref, atol=1e-5, rtol=1e-5), "f32 mismatch vs reference"

    # Mid-size check exercising the multi-step (pipelined, cdiv) grid path.
    x2 = jax.random.normal(jax.random.PRNGKey(1), (4, 32, 32, 32), dtype=jnp.float32)
    y2 = jax.block_until_ready(swish(x2))
    assert jnp.allclose(y2, x2 * jax.nn.sigmoid(x2), atol=1e-5, rtol=1e-5), "f32 mid mismatch"

    # bf16 path (native VPU/EUP compute); compare against f32 math on the same
    # rounded inputs with a bf16-appropriate tolerance.
    xb = x2.astype(jnp.bfloat16)
    yb = jax.block_until_ready(swish(xb))
    xb_f32 = xb.astype(jnp.float32)
    ref_b = xb_f32 * jax.nn.sigmoid(xb_f32)
    assert yb.dtype == jnp.bfloat16
    assert jnp.allclose(yb.astype(jnp.float32), ref_b, atol=5e-2, rtol=5e-2), "bf16 mismatch"

    print("KERNEL_OK")
</pallas_src>

<mosaic_0001>
module attributes {stable_mosaic.version = 11 : i64} {
  func.func @_swish_kernel(%arg0: i32, %arg1: memref<1x2048xf32, #tpu.memory_space<vmem>>, %arg2: memref<1x2048xf32, #tpu.memory_space<vmem>>) attributes {dimension_semantics = [#tpu.dimension_semantics<parallel>], iteration_bounds = array<i64: 1>, scalar_prefetch = 0 : i64, scratch_operands = 0 : i64, tpu.core_type = #tpu.core_type<tc>, window_params = [{transform_indices = @transform_0, window_bounds = array<i64: 1, 2048>}, {transform_indices = @transform_1, window_bounds = array<i64: 1, 2048>}]} {
    %c0 = arith.constant 0 : index
    %c0_0 = arith.constant 0 : index
    %0 = vector.load %arg1[%c0, %c0_0] : memref<1x2048xf32, #tpu.memory_space<vmem>>, vector<1x2048xf32>
    %cst = arith.constant 5.000000e-01 : f32
    %1 = vector.broadcast %cst : f32 to vector<1x2048xf32>
    %2 = arith.mulf %1, %0 : vector<1x2048xf32>
    %3 = math.tanh %2 : vector<1x2048xf32>
    %cst_1 = arith.constant 1.000000e+00 : f32
    %4 = vector.broadcast %cst_1 : f32 to vector<1x2048xf32>
    %5 = arith.addf %4, %3 : vector<1x2048xf32>
    %cst_2 = arith.constant 5.000000e-01 : f32
    %6 = vector.broadcast %cst_2 : f32 to vector<1x2048xf32>
    %7 = arith.mulf %6, %5 : vector<1x2048xf32>
    %8 = arith.mulf %0, %7 : vector<1x2048xf32>
    %c0_3 = arith.constant 0 : index
    %c0_4 = arith.constant 0 : index
    %9 = vector.load %arg2[%c0_3, %c0_4] : memref<1x2048xf32, #tpu.memory_space<vmem>>, vector<1x2048xf32>
    tpu.vector_store %arg2[%c0_3, %c0_4], %8 {strides = array<i32>} : memref<1x2048xf32, #tpu.memory_space<vmem>>, vector<1x2048xf32>,
    return
  }
  func.func @transform_0(%arg0: i32) -> (i32, i32) {
    %c0_i32 = arith.constant 0 : i32
    %c0_i32_0 = arith.constant 0 : i32
    return %arg0, %c0_i32 : i32, i32
  }
  func.func @transform_1(%arg0: i32) -> (i32, i32) {
    %c0_i32 = arith.constant 0 : i32
    %c0_i32_0 = arith.constant 0 : i32
    return %arg0, %c0_i32 : i32, i32
  }
}

</mosaic_0001>

<llo_original>
// kernel: tpu_custom_call.1
$region0: #{tpu_custom_call.1}
  #allocation0 [shape = 'u32[]', space=smem, size = 0x4, offset = 0x4, fixed_abs, tag = 'smem constant byte address 0x4 - core index']
  #allocation1 [shape = 'u32[144,128]{1,0:T(1,128)}', space=vmem, size = 0x12000, scoped, tag = 'internal scratch']
  %s0 = inlined_call_operand.hbm [shape: f32[1,2048], index: 0, kind: input, shape index: {}]
  %s1 = inlined_call_operand.hbm [shape: f32[1,2048], index: 1, kind: output, shape index: {}]
  %s2 = sld [smem:[#allocation0]]
  $region18: #{tpu_custom_call.1} parent=0
    _
  %s4 = ssub.s32 1, %s2
  %s5 = scalar_select 0, %s4, %s2
  $region1: #{tpu_custom_call.1} parent=0
    #allocation2 [shape = 'u8[8192]{0}', space=vmem, size = 0x2000, scoped, tag = 'input window, operand 0, single buffered']
    #allocation3 [shape = 's32[1]{0}', space=sflag, size = 0x4, scoped, tag = 'scoped memory for tpu_custom_call.1']
    #allocation4 [shape = 's32[1]{0}', space=sflag, size = 0x4, scoped, tag = 'scoped memory for tpu_custom_call.1']
    #allocation5 [shape = 'u8[8192]{0}', space=vmem, size = 0x2000, scoped, tag = 'output window, operand 0, single buffered']
    %6 = vsyncpa [#allocation3], 0
    %7 = vsyncpa [#allocation4], 0
    // Predicated region
    $region2: #{tpu_custom_call.1} parent=1 // pred_check
      _
    $region3: #{tpu_custom_call.1} parent=1 // pred_check_branch
      %9 = sbr.rel (0) target = $region5
    $region4: #{tpu_custom_call.1} parent=1 // pred_region
      %s11 = ssub.s32 256, 256
      %12 = vsyncadd [#allocation3], %s11
      %s14 = sshll.u32 [#allocation2], 4
      %s15 = int_to_ptr.vmem [resolvable:$true] %s14
      %17 = dma.hbm_to_vmem [thread:$0]  %s0, 256, %s15, [#allocation3]
    $region5: #{tpu_custom_call.1} parent=1 // pred_fallthru
      _
    // Predicated region
    $region6: #{tpu_custom_call.1} parent=1 // pred_check
      _
    $region7: #{tpu_custom_call.1} parent=1 // pred_check_branch
      %19 = sbr.rel (0) target = $region9
    $region8: #{tpu_custom_call.1} parent=1 // pred_region
      %20 = dma.done [#allocation3], 256
    $region9: #{tpu_custom_call.1} parent=1 // pred_fallthru
      _
    %v21 = vld [vmem:[#allocation2] sm:$0xff]
    %v22 = vld [vmem:[#allocation2 + $0x8] sm:$0xff]
    %v23 = vmul.f32 %v21, 0.5
    %v24 = vmul.f32 %v22, 0.5
    %v25 = vtanh.pop %v23
    %v26 = vtanh.pop %v24
    %v27 = vadd.f32 %v25, 1.0
    %v28 = vadd.f32 %v26, 1.0
    %v29 = vmul.f32 %v27, 0.5
    %v30 = vmul.f32 %v28, 0.5
    %v31 = vmul.f32 %v21, %v29
    %v32 = vmul.f32 %v22, %v30
    %33 = vst [vmem:[#allocation5] sm:$0xff] %v31
    %34 = vst [vmem:[#allocation5 + $0x8] sm:$0xff] %v32
    // Predicated region
    $region10: #{tpu_custom_call.1} parent=1 // pred_check
      _
    $region11: #{tpu_custom_call.1} parent=1 // pred_check_branch
      %36 = sbr.rel (0) target = $region13
    $region12: #{tpu_custom_call.1} parent=1 // pred_region
      %s38 = ssub.s32 256, 256
      %39 = vsyncadd [#allocation4], %s38
      %s41 = sshll.u32 [#allocation5], 4
      %s42 = int_to_ptr.vmem [resolvable:$true] %s41
      %44 = dma.vmem_to_hbm [thread:$0]  %s42, 256, %s1, [#allocation4]
    $region13: #{tpu_custom_call.1} parent=1 // pred_fallthru
      _
    // Predicated region
    $region14: #{tpu_custom_call.1} parent=1 // pred_check
      _
    $region15: #{tpu_custom_call.1} parent=1 // pred_check_branch
      %46 = sbr.rel (0) target = $region17
    $region16: #{tpu_custom_call.1} parent=1 // pred_region
      %47 = dma.done [#allocation4], 256
    $region17: #{tpu_custom_call.1} parent=1 // pred_fallthru
      _
    %48 = vsyncpa [#allocation3], 1
    %49 = vsyncpa [#allocation4], 1

</llo_original>
